<compile_context>
chip_gen: v7x
topology: tpu7x:2x2x1
jax: 0.10.0
libtpu: 0.0.40
codegen_flags: <defaults>
</compile_context>

<pallas_src>
import functools

import jax
import jax.numpy as jnp
from jax import lax
from jax.experimental import pallas as pl
from jax.experimental.pallas import tpu as pltpu


_MAX_TK = 32768                        # cap on K-tile width (lanes)
_FALLBACK_VMEM = 64 * 1024 * 1024      # assume smallest (v7x) if query fails


def _round_up(x, m):
    return ((x + m - 1) // m) * m


def _cdiv(a, b):
    return -(-a // b)


def _vmem_capacity_bytes():
    try:
        return int(pltpu.get_tpu_info().vmem_capacity_bytes)
    except Exception:
        return _FALLBACK_VMEM


def _plan_k_tiles(n, tk_cap, n_split):
    """K tiling: n_split * nk_s tiles of width tk (multiple of 128) covering n
    columns, with every tile start strictly inside [0, n).  Returns
    (tk, nk_s) or None if no such plan exists for this n_split."""
    n128 = _round_up(n, 128)
    tk0 = max(128, min(tk_cap, n128))
    nk = _cdiv(n128, tk0)
    nk = n_split * _cdiv(nk, n_split)
    tk = _round_up(_cdiv(n128, nk), 128)
    if (nk - 1) * tk >= n:
        return None
    return tk, nk // n_split


def _gram_diff_kernel(gen_ref, tgt_ref, out_ref, *,
                      n_valid, tile_k, total_k, mask_tail):
    """Accumulates gram(gen) - gram(tgt) for one (split, batch) output block.

    Grid = (S, B, nk_s) with semantics (parallel, parallel, arbitrary).  The
    output block index is constant across k, so out_ref stays VMEM-resident
    and is the f32 accumulator (no scratch, no finalize copy).
    """
    k = pl.program_id(2)

    @pl.when(k == 0)
    def _init():
        out_ref[...] = jnp.zeros_like(out_ref)

    # NT-form: contract trailing K dims.  Transposed RHS is handled natively
    # by the MXU lowering (no per-step XLU transpose of the (C, TK) tile).
    nt = (((1,), (1,)), ((), ()))

    def _accumulate(g, t):
        out_ref[...] += lax.dot_general(g, g, nt,
                                        preferred_element_type=jnp.float32)
        out_ref[...] -= lax.dot_general(t, t, nt,
                                        preferred_element_type=jnp.float32)

    if mask_tail:
        # The globally-last K tile extends past n_valid; its out-of-bounds
        # lanes hold unspecified data.  Mask only on that step (cheap VPU
        # select, hidden under the DMA); all other tiles run unmasked.
        global_k = pl.program_id(0) * pl.num_programs(2) + k
        is_tail = global_k == (total_k - 1)

        @pl.when(jnp.logical_not(is_tail))
        def _full():
            _accumulate(gen_ref[...], tgt_ref[...])

        @pl.when(is_tail)
        def _tail():
            col = (total_k - 1) * tile_k + lax.broadcasted_iota(
                jnp.int32, gen_ref.shape, 1)
            keep = col < n_valid
            zero = jnp.zeros(gen_ref.shape, gen_ref.dtype)
            _accumulate(jnp.where(keep, gen_ref[...], zero),
                        jnp.where(keep, tgt_ref[...], zero))
    else:
        _accumulate(gen_ref[...], tgt_ref[...])


def gram_loss_layer(generated, target, *, size_average=True):
    """Pallas equivalent of GramLossLayer.forward((generated, target))."""
    assert generated.shape == target.shape
    B, C, H, W = generated.shape
    N = H * W
    factor = 1.0 / (4.0 * (H ** 2) * (W ** 2))

    # bf16 inputs stay bf16 operands (half the HBM traffic; f32 accumulation
    # on the MXU) -> small numeric divergence vs. an f32 upcast.  f32 stays
    # f32; anything else is cast to f32.
    in_dtype = jnp.dtype(generated.dtype)
    if in_dtype not in (jnp.dtype(jnp.float32), jnp.dtype(jnp.bfloat16)):
        in_dtype = jnp.dtype(jnp.float32)
    itemsize = in_dtype.itemsize

    # ---- VMEM-aware K-tile sizing (per TPU generation) ---------------------
    vmem = _vmem_capacity_bytes()
    buf_budget = (vmem * 3) // 4          # input pipeline buffers
    vmem_limit = (vmem * 7) // 8          # scoped limit handed to Mosaic

    n128 = _round_up(N, 128)
    natural_tk = min(_MAX_TK, n128)
    tk_budget2 = max(128, (buf_budget // (2 * 2 * C * itemsize)) // 128 * 128)
    if natural_tk <= tk_budget2:
        nbuf, tk_cap = 2, natural_tk
    else:
        # K-tile is VMEM-capped (large C): on small-VMEM chips (v7x) deepen
        # the input pipeline to 3 buffers to hide the short-step bubble.
        nbuf = 3 if vmem <= 80 * 1024 * 1024 else 2
        tk_cap = max(128, (buf_budget // (2 * nbuf * C * itemsize)) // 128 * 128)

    # ---- optional K split so both v7x TensorCores stream HBM when B is odd -
    S = 1
    plan = None
    if B % 2 == 1:
        plan = _plan_k_tiles(N, tk_cap, 2)
        if plan is not None:
            S = 2
    if plan is None:
        plan = _plan_k_tiles(N, tk_cap, 1)
    assert plan is not None
    TK, nk_s = plan
    nk_total = S * nk_s
    mask_tail = (nk_total * TK) != N      # no wrapper-side jnp.pad copy

    gen_f = generated.reshape(B, C, N).astype(in_dtype)
    tgt_f = target.reshape(B, C, N).astype(in_dtype)

    def in_map(s, b, k, _nk_s=nk_s):
        return (b, 0, s * _nk_s + k)

    in_block = (None, C, TK)
    if nbuf == 3:
        in_spec = pl.BlockSpec(in_block, in_map, pipeline_mode=pl.Buffered(3))
    else:
        in_spec = pl.BlockSpec(in_block, in_map)

    kernel = functools.partial(
        _gram_diff_kernel,
        n_valid=N, tile_k=TK, total_k=nk_total, mask_tail=mask_tail)

    flops = 4 * B * C * C * nk_total * TK
    bytes_accessed = 2 * B * C * N * itemsize + S * B * C * C * 4

    grams = pl.pallas_call(
        kernel,
        out_shape=jax.ShapeDtypeStruct((S, B, C, C), jnp.float32),
        grid_spec=pltpu.PrefetchScalarGridSpec(
            num_scalar_prefetch=0,
            grid=(S, B, nk_s),
            in_specs=[in_spec, in_spec],
            out_specs=pl.BlockSpec((None, None, C, C),
                                   lambda s, b, k: (s, b, 0, 0)),
        ),
        compiler_params=pltpu.CompilerParams(
            dimension_semantics=("parallel", "parallel", "arbitrary"),
            vmem_limit_bytes=vmem_limit),
        cost_estimate=pl.CostEstimate(
            flops=flops, transcendentals=0, bytes_accessed=bytes_accessed),
    )(gen_f, tgt_f)

    # Tiny (S, B, C, C) reduction + squared-difference sum in plain JAX;
    # keeping it out of the kernel lets the S/B axes stay "parallel".
    diff = jnp.sum(grams, axis=(0, 1))
    if size_average:
        diff = diff / B
    return factor * jnp.sum(diff * diff)


def gram_loss(weight, feature_list, *, size_average=True):
    """Pallas equivalent of GramLoss.forward(feature_list) with dist_type='gram'."""
    assert len(weight) == len(feature_list)
    total = jnp.float32(0.0)
    for w, (gen, tgt) in zip(weight, feature_list):
        total = total + w * gram_loss_layer(gen, tgt, size_average=size_average)
    return total


# TODO(synk): dist_type='earth_move' requires a full per-row sort, which has no
# clean Pallas TPU primitive; only the 'gram' path is implemented as a kernel.


def _ref_gram_loss(weight, feature_list, size_average=True):
    """Pure-JAX reference matching the PyTorch semantics."""
    hi = jax.lax.Precision.HIGHEST
    total = 0.0
    for w, (gen, tgt) in zip(weight, feature_list):
        B, C, H, W = gen.shape
        gf = gen.reshape(B, C, -1).astype(jnp.float32)
        tf = tgt.reshape(B, C, -1).astype(jnp.float32)
        gg = jnp.einsum('bcn,bdn->bcd', gf, gf, precision=hi)
        gt_ = jnp.einsum('bcn,bdn->bcd', tf, tf, precision=hi)
        if size_average:
            gg, gt_ = gg.mean(0), gt_.mean(0)
        else:
            gg, gt_ = gg.sum(0), gt_.sum(0)
        factor = 1.0 / (4 * H ** 2 * W ** 2)
        total = total + w * factor * jnp.sum((gg - gt_) ** 2)
    return total


if __name__ == "__main__":
    key = jax.random.PRNGKey(0)
    k1, k2, k3, k4, k5, k6 = jax.random.split(key, 6)

    # Three "layers" of NCHW feature-map pairs:
    #   layer 0: B=2, C=4, 16x16 -> single full-width K tile, no masking
    #   layer 1: B=2, C=8, 8x8   -> N=64 < 128, exercises in-kernel tail mask
    #   layer 2: B=1, C=4, 12x12 -> odd batch, exercises the parallel K split
    #                               plus tail masking (N=144)
    feat_list = [
        (jax.random.normal(k1, (2, 4, 16, 16), dtype=jnp.float32),
         jax.random.normal(k2, (2, 4, 16, 16), dtype=jnp.float32)),
        (jax.random.normal(k3, (2, 8, 8, 8), dtype=jnp.float32),
         jax.random.normal(k4, (2, 8, 8, 8), dtype=jnp.float32)),
        (jax.random.normal(k5, (1, 4, 12, 12), dtype=jnp.float32),
         jax.random.normal(k6, (1, 4, 12, 12), dtype=jnp.float32)),
    ]
    # deterministic per-layer weights (GramLoss.__init__ weight argument)
    weight = [1.0, 0.5, 0.25]

    out = gram_loss(weight, feat_list, size_average=True)
    out = jax.block_until_ready(out)

    ref = _ref_gram_loss(weight, feat_list, size_average=True)
    assert jnp.allclose(out, ref, rtol=1e-5, atol=1e-5), (out, ref)

    print("KERNEL_OK")
</pallas_src>

<mosaic_0001>
module attributes {stable_mosaic.version = 11 : i64} {
  func.func @_gram_diff_kernel(%arg0: i32, %arg1: i32, %arg2: i32, %arg3: memref<1x4x256xf32, #tpu.memory_space<vmem>>, %arg4: memref<1x4x256xf32, #tpu.memory_space<vmem>>, %arg5: memref<1x1x4x4xf32, #tpu.memory_space<vmem>>) attributes {dimension_semantics = [#tpu.dimension_semantics<parallel>, #tpu.dimension_semantics<parallel>, #tpu.dimension_semantics<arbitrary>], iteration_bounds = array<i64: 1, 2, 1>, scalar_prefetch = 0 : i64, scratch_operands = 0 : i64, tpu.core_type = #tpu.core_type<tc>, window_params = [{transform_indices = @transform_0, window_bounds = array<i64: 1, 4, 256>}, {transform_indices = @transform_1, window_bounds = array<i64: 1, 4, 256>}, {transform_indices = @transform_2, window_bounds = array<i64: 1, 1, 4, 4>}]} {
    %c0_i32 = arith.constant 0 : i32
    %0 = arith.cmpi eq, %arg2, %c0_i32 : i32
    %1 = arith.extui %0 : i1 to i32
    %c0_i32_0 = arith.constant 0 : i32
    %2 = arith.cmpi ne, %1, %c0_i32_0 : i32
    scf.if %2 {
      %cst_23 = arith.constant 0.000000e+00 : f32
      %21 = vector.broadcast %cst_23 : f32 to vector<4x4xf32>
      %c0_24 = arith.constant 0 : index
      %c0_25 = arith.constant 0 : index
      %c0_26 = arith.constant 0 : index
      %c0_27 = arith.constant 0 : index
      %22 = vector.load %arg5[%c0_24, %c0_25, %c0_26, %c0_27] : memref<1x1x4x4xf32, #tpu.memory_space<vmem>>, vector<1x1x4x4xf32>
      %23 = vector.shape_cast %22 : vector<1x1x4x4xf32> to vector<4x4xf32>
      %24 = vector.shape_cast %21 : vector<4x4xf32> to vector<1x1x4x4xf32>
      tpu.vector_store %arg5[%c0_24, %c0_25, %c0_26, %c0_27], %24 {strides = array<i32>} : memref<1x1x4x4xf32, #tpu.memory_space<vmem>>, vector<1x1x4x4xf32>,
    } else {
    }
    %c0 = arith.constant 0 : index
    %c0_1 = arith.constant 0 : index
    %c0_2 = arith.constant 0 : index
    %3 = vector.load %arg3[%c0, %c0_1, %c0_2] : memref<1x4x256xf32, #tpu.memory_space<vmem>>, vector<1x4x256xf32>
    %4 = vector.shape_cast %3 : vector<1x4x256xf32> to vector<4x256xf32>
    %c0_3 = arith.constant 0 : index
    %c0_4 = arith.constant 0 : index
    %c0_5 = arith.constant 0 : index
    %5 = vector.load %arg4[%c0_3, %c0_4, %c0_5] : memref<1x4x256xf32, #tpu.memory_space<vmem>>, vector<1x4x256xf32>
    %6 = vector.shape_cast %5 : vector<1x4x256xf32> to vector<4x256xf32>
    %c0_6 = arith.constant 0 : index
    %c0_7 = arith.constant 0 : index
    %c0_8 = arith.constant 0 : index
    %c0_9 = arith.constant 0 : index
    %7 = vector.load %arg5[%c0_6, %c0_7, %c0_8, %c0_9] : memref<1x1x4x4xf32, #tpu.memory_space<vmem>>, vector<1x1x4x4xf32>
    %8 = vector.shape_cast %7 : vector<1x1x4x4xf32> to vector<4x4xf32>
    %cst = arith.constant dense<0.000000e+00> : vector<4x4xf32>
    %9 = tpu.matmul %4, %4, %cst {dimension_numbers = #tpu.dot_dimension_numbers<[1], [1], [0], [0], [0, 0, 1, 0], [], []>} : vector<4x256xf32>, vector<4x256xf32>, vector<4x4xf32> -> vector<4x4xf32>
    %10 = arith.addf %8, %9 : vector<4x4xf32>
    %c0_10 = arith.constant 0 : index
    %c0_11 = arith.constant 0 : index
    %c0_12 = arith.constant 0 : index
    %c0_13 = arith.constant 0 : index
    %11 = vector.load %arg5[%c0_10, %c0_11, %c0_12, %c0_13] : memref<1x1x4x4xf32, #tpu.memory_space<vmem>>, vector<1x1x4x4xf32>
    %12 = vector.shape_cast %11 : vector<1x1x4x4xf32> to vector<4x4xf32>
    %13 = vector.shape_cast %10 : vector<4x4xf32> to vector<1x1x4x4xf32>
    tpu.vector_store %arg5[%c0_10, %c0_11, %c0_12, %c0_13], %13 {strides = array<i32>} : memref<1x1x4x4xf32, #tpu.memory_space<vmem>>, vector<1x1x4x4xf32>,
    %c0_14 = arith.constant 0 : index
    %c0_15 = arith.constant 0 : index
    %c0_16 = arith.constant 0 : index
    %c0_17 = arith.constant 0 : index
    %14 = vector.load %arg5[%c0_14, %c0_15, %c0_16, %c0_17] : memref<1x1x4x4xf32, #tpu.memory_space<vmem>>, vector<1x1x4x4xf32>
    %15 = vector.shape_cast %14 : vector<1x1x4x4xf32> to vector<4x4xf32>
    %cst_18 = arith.constant dense<0.000000e+00> : vector<4x4xf32>
    %16 = tpu.matmul %6, %6, %cst_18 {dimension_numbers = #tpu.dot_dimension_numbers<[1], [1], [0], [0], [0, 0, 1, 0], [], []>} : vector<4x256xf32>, vector<4x256xf32>, vector<4x4xf32> -> vector<4x4xf32>
    %17 = arith.subf %15, %16 : vector<4x4xf32>
    %c0_19 = arith.constant 0 : index
    %c0_20 = arith.constant 0 : index
    %c0_21 = arith.constant 0 : index
    %c0_22 = arith.constant 0 : index
    %18 = vector.load %arg5[%c0_19, %c0_20, %c0_21, %c0_22] : memref<1x1x4x4xf32, #tpu.memory_space<vmem>>, vector<1x1x4x4xf32>
    %19 = vector.shape_cast %18 : vector<1x1x4x4xf32> to vector<4x4xf32>
    %20 = vector.shape_cast %17 : vector<4x4xf32> to vector<1x1x4x4xf32>
    tpu.vector_store %arg5[%c0_19, %c0_20, %c0_21, %c0_22], %20 {strides = array<i32>} : memref<1x1x4x4xf32, #tpu.memory_space<vmem>>, vector<1x1x4x4xf32>,
    return
  }
  func.func @transform_0(%arg0: i32, %arg1: i32, %arg2: i32) -> (i32, i32, i32) {
    %c1_i32 = arith.constant 1 : i32
    %0 = arith.muli %arg0, %c1_i32 : i32
    %1 = arith.addi %0, %arg2 : i32
    %c0_i32 = arith.constant 0 : i32
    %c0_i32_0 = arith.constant 0 : i32
    return %arg1, %c0_i32, %1 : i32, i32, i32
  }
  func.func @transform_1(%arg0: i32, %arg1: i32, %arg2: i32) -> (i32, i32, i32) {
    %c1_i32 = arith.constant 1 : i32
    %0 = arith.muli %arg0, %c1_i32 : i32
    %1 = arith.addi %0, %arg2 : i32
    %c0_i32 = arith.constant 0 : i32
    %c0_i32_0 = arith.constant 0 : i32
    return %arg1, %c0_i32, %1 : i32, i32, i32
  }
  func.func @transform_2(%arg0: i32, %arg1: i32, %arg2: i32) -> (i32, i32, i32, i32) {
    %c0_i32 = arith.constant 0 : i32
    %c0_i32_0 = arith.constant 0 : i32
    %c0_i32_1 = arith.constant 0 : i32
    return %arg0, %arg1, %c0_i32, %c0_i32_0 : i32, i32, i32, i32
  }
}

</mosaic_0001>

<llo_original>
// kernel: tpu_custom_call.1
$region0: #{tpu_custom_call.1}
  #allocation0 [shape = 'u32[]', space=smem, size = 0x4, offset = 0x4, fixed_abs, tag = 'smem constant byte address 0x4 - core index']
  #allocation1 [shape = 'u32[144,128]{1,0:T(1,128)}', space=vmem, size = 0x12000, scoped, tag = 'internal scratch']
  %s0 = inlined_call_operand.hbm [shape: f32[2,4,256], index: 0, kind: input, shape index: {}]
  %s1 = inlined_call_operand.hbm [shape: f32[2,4,256], index: 1, kind: input, shape index: {}]
  %s2 = inlined_call_operand.hbm [shape: f32[1,2,4,4], index: 2, kind: output, shape index: {}]
  %s3 = sld [smem:[#allocation0]]
  $region53: #{tpu_custom_call.1} parent=0
    _
  %s5 = ssub.s32 1, %s3
  %s6 = scalar_select 0, %s5, %s3
  $region1: #{tpu_custom_call.1} parent=0
    #allocation2 [shape = 'u8[8192]{0}', space=vmem, size = 0x2000, scoped, tag = 'input window, operand 0']
    #allocation3 [shape = 's32[2]{0}', space=sflag, size = 0x8, scoped, tag = 'scoped memory for tpu_custom_call.1']
    #allocation4 [shape = 's32[2]{0}', space=sflag, size = 0x8, scoped, tag = 'scoped memory for tpu_custom_call.1']
    #allocation5 [shape = 'u8[8192]{0}', space=vmem, size = 0x2000, scoped, tag = 'input window, operand 1']
    #allocation6 [shape = 's32[2]{0}', space=sflag, size = 0x8, scoped, tag = 'scoped memory for tpu_custom_call.1']
    #allocation7 [shape = 'u8[4096]{0}', space=vmem, size = 0x1000, scoped, tag = 'output window, operand 0']
    %7 = vsyncpa [#allocation3], 0
    %s8 = scalar_lea.sflag [#allocation3], 1
    %9 = vsyncpa %s8, 0
    %10 = vsyncpa [#allocation6], 0
    %s11 = scalar_lea.sflag [#allocation6], 1
    %12 = vsyncpa %s11, 0
    %13 = vsyncpa [#allocation4], 0
    %s14 = scalar_lea.sflag [#allocation4], 1
    %15 = vsyncpa %s14, 0
    loop: start=0, step=1, limit=4
    $region2: #{tpu_custom_call.1} parent=1 // loop_pre_header
      _
    $region3: #{tpu_custom_call.1} parent=1 // loop_header
      %s17 = sphi 0, %s21
      %p18 = scmp.ge.s32.totalorder %s17, 4
      %s24 = sphi 0, %s43
      %s25 = sphi 0, %s39
      %s26 = sphi 0, %s35
      %s27 = sphi 0, %s24
      %s28 = sphi 0, %s25
      %s29 = sphi 0, %s26
      %s30 = sphi 0, %s27
      %s31 = sphi 0, %s28
      %s32 = sphi 0, %s29
      %s50 = sphi 0, %s52
      %s53 = sphi 0, %s50
      %s54 = sphi 0, %s53
      %s70 = sphi 0, %s54
      %s80 = sphi 0, %s82
      %s83 = sphi 0, %s80
      %s84 = sphi 0, %s83
      %s100 = sphi 0, %s84
      %s108 = sphi 0, %s110
      %s111 = sphi 0, %s108
      %s112 = sphi 0, %s111
      %s128 = sphi 0, %s112
    $region4: #{tpu_custom_call.1} parent=1 // loop_header_branch
      %20 = sbr.rel (%p18) target = $region8
    $region5: #{tpu_custom_call.1} parent=1 // loop_body
      %s22 = ssub.s32 %s17, 1
      %s23 = ssub.s32 %s17, 2
      %s33 = sadd.s32 1, %s26
      %p34 = scmp.ge.s32.totalorder %s33, 1
      %s35 = scalar_select %p34, 0, %s33
      %s36 = sadd.s32 1, %s25
      %s37 = scalar_select %p34, %s36, %s25
      %p38 = scmp.ge.s32.totalorder %s37, 2
      %s39 = scalar_select %p38, 0, %s37
      %s40 = sadd.s32 1, %s24
      %s41 = scalar_select %p38, %s40, %s24
      %p42 = scmp.ge.s32.totalorder %s41, 1
      %s43 = scalar_select %p42, 0, %s41
      %s44 = sadd.s32 %s24, %s26
      %s45 = sadd.s32 %s43, %s35
      %s46 = ssub.s32 %s25, %s39
      %s47 = ssub.s32 %s44, %s45
      %s48 = sor.u32 %s46, %s47
      %p49 = scmp.eq.s32.totalorder %s48, 0
      %s51 = sadd.s32 %s50, 1
      %s52 = scalar_select %p49, %s50, %s51
      %p55 = pneg %p49
      %p56 = scmp.eq.s32.totalorder %s17, 1
      %p57 = por %p55, %p56
      %p58 = scmp.ne.s32.totalorder %s50, %s53
      %p59 = scmp.eq.s32.totalorder %s17, 0
      %p60 = por %p58, %p59
      %p61 = scmp.ne.s32.totalorder %s50, %s53
      %p62 = scmp.eq.s32.totalorder %s22, 1
      %p63 = por %p61, %p62
      %p64 = scmp.ne.s32.totalorder %s53, %s54
      %p65 = scmp.eq.s32.totalorder %s22, 0
      %p66 = por %p64, %p65
      %p67 = scmp.ne.s32.totalorder %s53, %s54
      %p68 = scmp.eq.s32.totalorder %s23, 1
      %p69 = por %p67, %p68
      %p71 = scmp.ne.s32.totalorder %s54, %s70
      %p72 = scmp.eq.s32.totalorder %s23, 0
      %p73 = por %p71, %p72
      %s74 = sadd.s32 %s24, %s26
      %s75 = sadd.s32 %s43, %s35
      %s76 = ssub.s32 %s25, %s39
      %s77 = ssub.s32 %s74, %s75
      %s78 = sor.u32 %s76, %s77
      %p79 = scmp.eq.s32.totalorder %s78, 0
      %s81 = sadd.s32 %s80, 1
      %s82 = scalar_select %p79, %s80, %s81
      %p85 = pneg %p79
      %p86 = scmp.eq.s32.totalorder %s17, 1
      %p87 = por %p85, %p86
      %p88 = scmp.ne.s32.totalorder %s80, %s83
      %p89 = scmp.eq.s32.totalorder %s17, 0
      %p90 = por %p88, %p89
      %p91 = scmp.ne.s32.totalorder %s80, %s83
      %p92 = scmp.eq.s32.totalorder %s22, 1
      %p93 = por %p91, %p92
      %p94 = scmp.ne.s32.totalorder %s83, %s84
      %p95 = scmp.eq.s32.totalorder %s22, 0
      %p96 = por %p94, %p95
      %p97 = scmp.ne.s32.totalorder %s83, %s84
      %p98 = scmp.eq.s32.totalorder %s23, 1
      %p99 = por %p97, %p98
      %p101 = scmp.ne.s32.totalorder %s84, %s100
      %p102 = scmp.eq.s32.totalorder %s23, 0
      %p103 = por %p101, %p102
      %s104 = ssub.s32 %s24, %s43
      %s105 = ssub.s32 %s25, %s39
      %s106 = sor.u32 %s104, %s105
      %p107 = scmp.eq.s32.totalorder %s106, 0
      %s109 = sadd.s32 %s108, 1
      %s110 = scalar_select %p107, %s108, %s109
      %p113 = pneg %p107
      %p114 = scmp.eq.s32.totalorder %s17, 1
      %p115 = por %p113, %p114
      %p116 = scmp.ne.s32.totalorder %s108, %s111
      %p117 = scmp.eq.s32.totalorder %s17, 0
      %p118 = por %p116, %p117
      %p119 = scmp.ne.s32.totalorder %s108, %s111
      %p120 = scmp.eq.s32.totalorder %s22, 1
      %p121 = por %p119, %p120
      %p122 = scmp.ne.s32.totalorder %s111, %s112
      %p123 = scmp.eq.s32.totalorder %s22, 0
      %p124 = por %p122, %p123
      %p125 = scmp.ne.s32.totalorder %s111, %s112
      %p126 = scmp.eq.s32.totalorder %s23, 1
      %p127 = por %p125, %p126
      %p129 = scmp.ne.s32.totalorder %s112, %s128
      %p130 = scmp.eq.s32.totalorder %s23, 0
      %p131 = por %p129, %p130
      %p132 = scmp.le.s32.totalorder 1, %s17
      %p133 = scmp.lt.s32.totalorder %s17, 3
      %p134 = pnand %p132, %p133
      %p135 = pneg %p134
      // Predicated region
      $region9: #{tpu_custom_call.1} parent=5 // pred_check
        _
      $region10: #{tpu_custom_call.1} parent=5 // pred_check_branch
        %137 = sbr.rel (%p134) target = $region12
      $region11: #{tpu_custom_call.1} parent=5 // pred_region
        %s138 = ssub.s32 %s17, 1
      $region12: #{tpu_custom_call.1} parent=5 // pred_fallthru
        _
      %p139 = scmp.lt.s32.totalorder %s17, 2
      // Predicated region
      $region13: #{tpu_custom_call.1} parent=5 // pred_check
        %p140 = pneg %p139
      $region14: #{tpu_custom_call.1} parent=5 // pred_check_branch
        %142 = sbr.rel (%p140) target = $region16
      $region15: #{tpu_custom_call.1} parent=5 // pred_region
        // Predicated region
        $region17: #{tpu_custom_call.1} parent=15 // pred_check
          %p143 = pneg %p60
        $region18: #{tpu_custom_call.1} parent=15 // pred_check_branch
          %145 = sbr.rel (%p143) target = $region20
        $region19: #{tpu_custom_call.1} parent=15 // pred_region
          %s146 = sand.u32 %s50, 1
          %s147 = scalar_lea.sflag [#allocation3], %s146
          %s148 = sand.u32 %s50, 1
          %s149 = smul.addr %s148, 8
          %s150 = scalar_lea.vmem [#allocation2], %s149
          %s151 = sadd.s32 %s24, %s26
          %s152 = smul.u32 2, %s151
          %s154 = ssub.s32 128, 128
          %155 = vsyncadd %s147, %s154
          %s156 = smul.addr %s25, 2
          %s157 = sadd.s32 %s152, %s156
          %s158 = smul.addr %s157, 64
          %s159 = scalar_lea.hbm %s0, %s158
          %s161 = sshll.u32 %s150, 4
          %s162 = int_to_ptr.vmem [resolvable:$true] %s161
          %164 = dma.hbm_to_vmem [thread:$0]  %s159, 128, %s162, %s147
        $region20: #{tpu_custom_call.1} parent=15 // pred_fallthru
          _
        // Predicated region
        $region21: #{tpu_custom_call.1} parent=15 // pred_check
          %p165 = pneg %p90
        $region22: #{tpu_custom_call.1} parent=15 // pred_check_branch
          %167 = sbr.rel (%p165) target = $region24
        $region23: #{tpu_custom_call.1} parent=15 // pred_region
          %s168 = sand.u32 %s80, 1
          %s169 = scalar_lea.sflag [#allocation6], %s168
          %s170 = sand.u32 %s80, 1
          %s171 = smul.addr %s170, 8
          %s172 = scalar_lea.vmem [#allocation5], %s171
          %s173 = sadd.s32 %s24, %s26
          %s174 = smul.u32 2, %s173
          %s176 = ssub.s32 128, 128
          %177 = vsyncadd %s169, %s176
          %s178 = smul.addr %s25, 2
          %s179 = sadd.s32 %s174, %s178
          %s180 = smul.addr %s179, 64
          %s181 = scalar_lea.hbm %s1, %s180
          %s183 = sshll.u32 %s172, 4
          %s184 = int_to_ptr.vmem [resolvable:$true] %s183
          %186 = dma.hbm_to_vmem [thread:$0]  %s181, 128, %s184, %s169
        $region24: #{tpu_custom_call.1} parent=15 // pred_fallthru
          _
      $region16: #{tpu_custom_call.1} parent=5 // pred_fallthru
        _
      %p187 = scmp.le.s32.totalorder 1, %s17
      %p188 = scmp.lt.s32.totalorder %s17, 3
      %p189 = pnand %p187, %p188
      %p190 = pneg %p189
      // Predicated region
      $region25: #{tpu_custom_call.1} parent=5 // pred_check
        _
      $region26: #{tpu_custom_call.1} parent=5 // pred_check_branch
        %192 = sbr.rel (%p189) target = $region28
      $region27: #{tpu_custom_call.1} parent=5 // pred_region
        %s193 = ssub.s32 %s17, 1
        %s194 = sand.u32 %s53, 1
        %s195 = scalar_lea.sflag [#allocation3], %s194
        %s196 = sand.u32 %s53, 1
        %s197 = smul.addr %s196, 8
        %s198 = scalar_lea.vmem [#allocation2], %s197
        // Predicated region
        $region29: #{tpu_custom_call.1} parent=27 // pred_check
          %p199 = pneg %p66
        $region30: #{tpu_custom_call.1} parent=27 // pred_check_branch
          %201 = sbr.rel (%p199) target = $region32
        $region31: #{tpu_custom_call.1} parent=27 // pred_region
          %202 = dma.done %s195, 128
        $region32: #{tpu_custom_call.1} parent=27 // pred_fallthru
          _
        %s203 = sand.u32 %s83, 1
        %s204 = scalar_lea.sflag [#allocation6], %s203
        %s205 = sand.u32 %s83, 1
        %s206 = smul.addr %s205, 8
        %s207 = scalar_lea.vmem [#allocation5], %s206
        // Predicated region
        $region33: #{tpu_custom_call.1} parent=27 // pred_check
          %p208 = pneg %p96
        $region34: #{tpu_custom_call.1} parent=27 // pred_check_branch
          %210 = sbr.rel (%p208) target = $region36
        $region35: #{tpu_custom_call.1} parent=27 // pred_region
          %211 = dma.done %s204, 128
        $region36: #{tpu_custom_call.1} parent=27 // pred_fallthru
          _
        %s212 = sand.u32 %s53, 1
        %s213 = scalar_lea.sflag [#allocation3], %s212
        %s214 = sand.u32 %s53, 1
        %s215 = smul.addr %s214, 8
        %s216 = scalar_lea.vmem [#allocation2], %s215
        %p217 = pneg %p66
        %p218 = pneg %p63
        %s219 = sand.u32 %s83, 1
        %s220 = scalar_lea.sflag [#allocation6], %s219
        %s221 = sand.u32 %s83, 1
        %s222 = smul.addr %s221, 8
        %s223 = scalar_lea.vmem [#allocation5], %s222
        %p224 = pneg %p96
        %p225 = pneg %p93
        %p226 = pneg %p124
        %p227 = pneg %p121
        %s228 = sand.u32 %s111, 1
        %s229 = scalar_lea.sflag [#allocation4], %s228
        %s230 = sand.u32 %s111, 1
        %s231 = smul.addr %s230, 4
        %s232 = scalar_lea.vmem [#allocation7], %s231
        %s233 = sadd.s32 %s27, %s29
        %s234 = smul.u32 2, %s233
        %s235 = sadd.s32 %s27, %s29
        %s236 = smul.u32 2, %s235
        %p237 = scmp.eq.s32.totalorder %s29, 0
        // Predicated region
        $region37: #{tpu_custom_call.1} parent=27 // pred_check
          %p238 = pneg %p237
        $region38: #{tpu_custom_call.1} parent=27 // pred_check_branch
          %240 = sbr.rel (%p238) target = $region40
        $region39: #{tpu_custom_call.1} parent=27 // pred_region
          %vm241 = vcmask 27648
          %242 = vst.msk [vmem:[%s232] sm:$0xf] %vm241, 0.0
        $region40: #{tpu_custom_call.1} parent=27 // pred_fallthru
          _
        %v243 = vld [vmem:[%s198] sm:$0xff]
        %v244 = vld [vmem:[%s207] sm:$0xff]
        %v245 = vld [vmem:[%s232] sm:$0xf]
        %v247 = vcombine.high %v243, %v243
        %249 = vmatprep.subr.mxu0 %v247
        %250 = vmatpush1.xpose.msra.mxu0 %v243
        %251 = vmatprep.subr.mxu0 0.0
        %252 = vmatpush1.xpose.msra.mxu0 0.0
        %253 = vmatprep.subr.mxu0 0.0
        %254 = vmatpush1.xpose.msra.mxu0 0.0
        %255 = vmatprep.subr.mxu0 0.0
        %256 = vmatpush1.xpose.msra.mxu0 0.0
        %257 = vmatprep.subr.mxu0 0.0
        %258 = vmatpush1.xpose.msra.mxu0 0.0
        %259 = vmatprep.subr.mxu0 0.0
        %260 = vmatpush1.xpose.msra.mxu0 0.0
        %261 = vmatprep.subr.mxu0 0.0
        %262 = vmatpush1.xpose.msra.mxu0 0.0
        %263 = vmatprep.subr.mxu0 0.0
        %264 = vmatpush1.xpose.msra.mxu0 0.0
        %265 = vmatprep.subr.mxu0 0.0
        %266 = vmatpush1.xpose.msra.mxu0 0.0
        %267 = vmatprep.subr.mxu0 0.0
        %268 = vmatpush1.xpose.msra.mxu0 0.0
        %269 = vmatprep.subr.mxu0 0.0
        %270 = vmatpush1.xpose.msra.mxu0 0.0
        %271 = vmatprep.subr.mxu0 0.0
        %272 = vmatpush1.xpose.msra.mxu0 0.0
        %273 = vmatprep.subr.mxu0 0.0
        %274 = vmatpush1.xpose.msra.mxu0 0.0
        %275 = vmatprep.subr.mxu0 0.0
        %276 = vmatpush1.xpose.msra.mxu0 0.0
        %277 = vmatprep.subr.mxu0 0.0
        %278 = vmatpush1.xpose.msra.mxu0 0.0
        %279 = vmatprep.subr.mxu0 0.0
        %280 = vmatpush1.xpose.msra.mxu0 0.0
        %281 = vmatprep.subr.mxu0 0.0
        %282 = vmatpush1.xpose.msra.mxu0 0.0
        %283 = vmatprep.subr.mxu0 0.0
        %284 = vmatpush1.xpose.msra.mxu0 0.0
        %285 = vmatprep.subr.mxu0 0.0
        %286 = vmatpush1.xpose.msra.mxu0 0.0
        %287 = vmatprep.subr.mxu0 0.0
        %288 = vmatpush1.xpose.msra.mxu0 0.0
        %289 = vmatprep.subr.mxu0 0.0
        %290 = vmatpush1.xpose.msra.mxu0 0.0
        %291 = vmatprep.subr.mxu0 0.0
        %292 = vmatpush1.xpose.msra.mxu0 0.0
        %293 = vmatprep.subr.mxu0 0.0
        %294 = vmatpush1.xpose.msra.mxu0 0.0
        %295 = vmatprep.subr.mxu0 0.0
        %296 = vmatpush1.xpose.msra.mxu0 0.0
        %297 = vmatprep.subr.mxu0 0.0
        %298 = vmatpush1.xpose.msra.mxu0 0.0
        %299 = vmatprep.subr.mxu0 0.0
        %300 = vmatpush1.xpose.msra.mxu0 0.0
        %301 = vmatprep.subr.mxu0 0.0
        %302 = vmatpush1.xpose.msra.mxu0 0.0
        %303 = vmatprep.subr.mxu0 0.0
        %304 = vmatpush1.xpose.msra.mxu0 0.0
        %305 = vmatprep.subr.mxu0 0.0
        %306 = vmatpush1.xpose.msra.mxu0 0.0
        %307 = vmatprep.subr.mxu0 0.0
        %308 = vmatpush1.xpose.msra.mxu0 0.0
        %309 = vmatprep.subr.mxu0 0.0
        %310 = vmatpush1.xpose.msra.mxu0 0.0
        %311 = vmatprep.subr.mxu0 0.0
        %312 = vmatpush1.xpose.msra.mxu0 0.0
        %313 = vmatprep.mubr.f32.mxu0 %v247
        %314 = vmatmul.mubr.f32.gmra.mrb[0].mxu0 %v243
        %v315 = vpop.f32.mrb[0].mxu0
        %v316 = vadd.f32 0.0, %v315
        %v317 = vpop.f32.mrb[0].mxu0
        %318 = vdwg.mxu0
        %v319 = vadd.f32 %v245, %v316
        %vm320 = vcmask 27648
        %321 = vst.msk [vmem:[%s232] sm:$0xf] %vm320, %v319
        %v322 = vld [vmem:[%s232] sm:$0xf]
        %v324 = vcombine.high %v244, %v244
        %326 = vmatprep.subr.mxu0 %v324
        %327 = vmatpush1.xpose.msra.mxu0 %v244
        %328 = vmatprep.subr.mxu0 0.0
        %329 = vmatpush1.xpose.msra.mxu0 0.0
        %330 = vmatprep.subr.mxu0 0.0
        %331 = vmatpush1.xpose.msra.mxu0 0.0
        %332 = vmatprep.subr.mxu0 0.0
        %333 = vmatpush1.xpose.msra.mxu0 0.0
        %334 = vmatprep.subr.mxu0 0.0
        %335 = vmatpush1.xpose.msra.mxu0 0.0
        %336 = vmatprep.subr.mxu0 0.0
        %337 = vmatpush1.xpose.msra.mxu0 0.0
        %338 = vmatprep.subr.mxu0 0.0
        %339 = vmatpush1.xpose.msra.mxu0 0.0
        %340 = vmatprep.subr.mxu0 0.0
        %341 = vmatpush1.xpose.msra.mxu0 0.0
        %342 = vmatprep.subr.mxu0 0.0
        %343 = vmatpush1.xpose.msra.mxu0 0.0
        %344 = vmatprep.subr.mxu0 0.0
        %345 = vmatpush1.xpose.msra.mxu0 0.0
        %346 = vmatprep.subr.mxu0 0.0
        %347 = vmatpush1.xpose.msra.mxu0 0.0
        %348 = vmatprep.subr.mxu0 0.0
        %349 = vmatpush1.xpose.msra.mxu0 0.0
        %350 = vmatprep.subr.mxu0 0.0
        %351 = vmatpush1.xpose.msra.mxu0 0.0
        %352 = vmatprep.subr.mxu0 0.0
        %353 = vmatpush1.xpose.msra.mxu0 0.0
        %354 = vmatprep.subr.mxu0 0.0
        %355 = vmatpush1.xpose.msra.mxu0 0.0
        %356 = vmatprep.subr.mxu0 0.0
        %357 = vmatpush1.xpose.msra.mxu0 0.0
        %358 = vmatprep.subr.mxu0 0.0
        %359 = vmatpush1.xpose.msra.mxu0 0.0
        %360 = vmatprep.subr.mxu0 0.0
        %361 = vmatpush1.xpose.msra.mxu0 0.0
        %362 = vmatprep.subr.mxu0 0.0
        %363 = vmatpush1.xpose.msra.mxu0 0.0
        %364 = vmatprep.subr.mxu0 0.0
        %365 = vmatpush1.xpose.msra.mxu0 0.0
        %366 = vmatprep.subr.mxu0 0.0
        %367 = vmatpush1.xpose.msra.mxu0 0.0
        %368 = vmatprep.subr.mxu0 0.0
        %369 = vmatpush1.xpose.msra.mxu0 0.0
        %370 = vmatprep.subr.mxu0 0.0
        %371 = vmatpush1.xpose.msra.mxu0 0.0
        %372 = vmatprep.subr.mxu0 0.0
        %373 = vmatpush1.xpose.msra.mxu0 0.0
        %374 = vmatprep.subr.mxu0 0.0
        %375 = vmatpush1.xpose.msra.mxu0 0.0
        %376 = vmatprep.subr.mxu0 0.0
        %377 = vmatpush1.xpose.msra.mxu0 0.0
        %378 = vmatprep.subr.mxu0 0.0
        %379 = vmatpush1.xpose.msra.mxu0 0.0
        %380 = vmatprep.subr.mxu0 0.0
        %381 = vmatpush1.xpose.msra.mxu0 0.0
        %382 = vmatprep.subr.mxu0 0.0
        %383 = vmatpush1.xpose.msra.mxu0 0.0
        %384 = vmatprep.subr.mxu0 0.0
        %385 = vmatpush1.xpose.msra.mxu0 0.0
        %386 = vmatprep.subr.mxu0 0.0
        %387 = vmatpush1.xpose.msra.mxu0 0.0
        %388 = vmatprep.subr.mxu0 0.0
        %389 = vmatpush1.xpose.msra.mxu0 0.0
        %390 = vmatprep.mubr.f32.mxu0 %v324
        %391 = vmatmul.mubr.f32.gmra.mrb[0].mxu0 %v244
        %v392 = vpop.f32.mrb[0].mxu0
        %v393 = vadd.f32 0.0, %v392
        %v394 = vpop.f32.mrb[0].mxu0
        %395 = vdwg.mxu0
        %v396 = vsub.f32 %v322, %v393
        %397 = vst.msk [vmem:[%s232] sm:$0xf] %vm320, %v396
        %s398 = sand.u32 %s111, 1
        %s399 = scalar_lea.sflag [#allocation4], %s398
        %s400 = sand.u32 %s111, 1
        %s401 = smul.addr %s400, 4
        %s402 = scalar_lea.vmem [#allocation7], %s401
        // Predicated region
        $region41: #{tpu_custom_call.1} parent=27 // pred_check
          %p403 = pneg %p121
        $region42: #{tpu_custom_call.1} parent=27 // pred_check_branch
          %405 = sbr.rel (%p403) target = $region44
        $region43: #{tpu_custom_call.1} parent=27 // pred_region
          %s407 = ssub.s32 64, 64
          %408 = vsyncadd %s399, %s407
          %s409 = smul.addr %s27, 2
          %s410 = sadd.s32 %s28, %s409
          %s411 = smul.addr %s410, 64
          %s412 = scalar_lea.hbm %s2, %s411
          %s414 = sshll.u32 %s402, 4
          %s415 = int_to_ptr.vmem [resolvable:$true] %s414
          %417 = dma.vmem_to_hbm [thread:$0]  %s415, 64, %s412, %s399
        $region44: #{tpu_custom_call.1} parent=27 // pred_fallthru
          _
      $region28: #{tpu_custom_call.1} parent=5 // pred_fallthru
        _
      %p418 = scmp.le.s32.totalorder 2, %s17
      // Predicated region
      $region45: #{tpu_custom_call.1} parent=5 // pred_check
        %p419 = pneg %p418
      $region46: #{tpu_custom_call.1} parent=5 // pred_check_branch
        %421 = sbr.rel (%p419) target = $region48
      $region47: #{tpu_custom_call.1} parent=5 // pred_region
        %s422 = ssub.s32 %s17, 2
        // Predicated region
        $region49: #{tpu_custom_call.1} parent=47 // pred_check
          %p423 = pneg %p127
        $region50: #{tpu_custom_call.1} parent=47 // pred_check_branch
          %425 = sbr.rel (%p423) target = $region52
        $region51: #{tpu_custom_call.1} parent=47 // pred_region
          %s426 = sand.u32 %s112, 1
          %s427 = scalar_lea.sflag [#allocation4], %s426
          %s428 = sand.u32 %s112, 1
          %s429 = smul.addr %s428, 4
          %s430 = scalar_lea.vmem [#allocation7], %s429
          %431 = dma.done %s427, 64
        $region52: #{tpu_custom_call.1} parent=47 // pred_fallthru
          _
      $region48: #{tpu_custom_call.1} parent=5 // pred_fallthru
        _
    $region6: #{tpu_custom_call.1} parent=1 // loop_footer
      %s21 = sadd.s32 1, %s17
    $region7: #{tpu_custom_call.1} parent=1 // loop_footer_branch
      %16 = sbr.rel target = $region3
    $region8: #{tpu_custom_call.1} parent=1 // loop_exit
      _
    %432 = vsyncpa [#allocation3], 1
    %s433 = scalar_lea.sflag [#allocation3], 1
    %434 = vsyncpa %s433, 1
    %435 = vsyncpa [#allocation6], 1
    %s436 = scalar_lea.sflag [#allocation6], 1
    %437 = vsyncpa %s436, 1
    %438 = vsyncpa [#allocation4], 1
    %s439 = scalar_lea.sflag [#allocation4], 1
    %440 = vsyncpa %s439, 1

</llo_original>
